<compile_context>
chip_gen: v5e
topology: v5e:2x2
jax: 0.10.0
libtpu: 0.0.40
codegen_flags: <defaults>
</compile_context>

<pallas_src>
import jax
import jax.numpy as jnp
from jax.experimental import pallas as pl
from jax.experimental.pallas import tpu as pltpu


def _round_up(x, m):
    return ((x + m - 1) // m) * m


def _choose_tb(B):
    """Batch tile: multiple of 8, <=512, minimal padding, grid>=2 when B>8 (v7x)."""
    if B <= 8:
        return _round_up(max(B, 1), 8)
    cap = min(512, _round_up(pl.cdiv(B, 2), 8))     # cap < B  ->  grid >= 2
    best_tb, best_pad = None, None
    for tb in range(cap, 7, -8):                    # descending: prefer larger TB on ties
        pad = _round_up(B, tb)
        if best_pad is None or pad < best_pad:
            best_tb, best_pad = tb, pad
    return best_tb


def _cnn_kernel(x_ref, a_ref, fwt_ref, fb_ref, out_ref):
    """Fused Conv1d(k=3) + ReLU + MaxPool1d(2) + Linear for a tile of TB samples.

    Ref shapes (VMEM):
      x_ref   : (TB, L_pad)    bf16  zero-padded input, ones-column at index L (bias)
      a_ref   : (L_pad, 2F)    bf16  [A_even | A_odd] dense conv matrices + bias row
      fwt_ref : (F, NCP)       bf16  fc weight^T, zero-padded to 128 lanes
      fb_ref  : (1, NCP)       f32   fc bias, zero-padded
      out_ref : (TB, NCP)      f32   padded logits
    """
    F = a_ref.shape[1] // 2

    # Conv1d (even & odd pool positions) + bias in a single bf16 MXU matmul, f32 acc.
    y = jnp.dot(x_ref[...], a_ref[...], preferred_element_type=jnp.float32)  # (TB, 2F)
    conv_e = y[:, :F]
    conv_o = y[:, F:]

    # ReLU fused into the pool: max(relu(e), relu(o)) == max(max(e, o), 0).
    pooled = jnp.maximum(jnp.maximum(conv_e, conv_o), 0.0)                   # (TB, F)

    # FC layer: bf16 MXU matmul with f32 accumulation, lane-dense padded output.
    logits = jnp.dot(pooled.astype(jnp.bfloat16), fwt_ref[...],
                     preferred_element_type=jnp.float32) + fb_ref[...]
    out_ref[...] = logits.astype(out_ref.dtype)


@jax.jit
def cnn_multiclass_forward(x, conv_w, conv_b, fc_w, fc_b):
    """x: (B, input_size) float32. Returns logits (B, num_classes)."""
    B, L = x.shape
    C, cin, K = conv_w.shape
    assert cin == 1 and K == 3, "module fixes Conv1d(1, 32, kernel_size=3)"
    Lc = L - K + 1
    P = Lc // 2                      # MaxPool1d(2) output width
    F = C * P                        # flattened feature size (must be 32*32)
    NC = fc_w.shape[0]
    assert fc_w.shape[1] == F, "input_size incompatible with fc1 (needs 32*32 features)"

    L_pad = _round_up(L + 1, 128)    # +1: row L is the bias row / ones-column
    NCP = _round_up(NC, 128)         # lane-dense FC output / store width
    TB = _choose_tb(B)
    B_pad = _round_up(B, TB)
    grid = B_pad // TB

    # Input slab (bf16), with a ones-column at index L to carry the conv bias.
    x_pad = jnp.zeros((B_pad, L_pad), jnp.bfloat16)
    x_pad = x_pad.at[:B, :L].set(x.astype(jnp.bfloat16))
    x_pad = x_pad.at[:, L].set(jnp.bfloat16(1.0))

    # Dense conv matrices: A_even[j, c*P+p] = w[c,k] iff j == 2p+k   (conv output 2p),
    #                      A_odd [j, c*P+p] = w[c,k] iff j == 2p+1+k (conv output 2p+1).
    # Max tap row index is L-1 < L, so row L is free for the bias.
    w = conv_w[:, 0, :].astype(jnp.float32)                  # (C, K)
    j = jnp.arange(L_pad)[:, None]                           # (L_pad, 1)
    p = jnp.arange(P)[None, :]                               # (1, P)
    A_e = jnp.zeros((L_pad, C, P), jnp.float32)
    A_o = jnp.zeros((L_pad, C, P), jnp.float32)
    for k in range(K):
        sel_e = (j == 2 * p + k).astype(jnp.float32)         # (L_pad, P)
        sel_o = (j == 2 * p + 1 + k).astype(jnp.float32)
        A_e = A_e + sel_e[:, None, :] * w[None, :, k, None]
        A_o = A_o + sel_o[:, None, :] * w[None, :, k, None]
    A = jnp.concatenate([A_e.reshape(L_pad, F), A_o.reshape(L_pad, F)], axis=1)
    cb_rep = jnp.repeat(conv_b.astype(jnp.float32), P)       # channel-major (C*P,)
    A = A.at[L, :F].set(cb_rep).at[L, F:].set(cb_rep)        # bias row (x[:, L] == 1)
    A = A.astype(jnp.bfloat16)                               # (L_pad, 2F) bf16

    fwt = jnp.zeros((F, NCP), jnp.bfloat16).at[:, :NC].set(fc_w.T.astype(jnp.bfloat16))
    fb = jnp.zeros((1, NCP), jnp.float32).at[:, :NC].set(fc_b.astype(jnp.float32))

    flops = 2 * B_pad * L_pad * 2 * F + 2 * B_pad * F * NCP
    bytes_accessed = (B_pad * L_pad * 2 + L_pad * 2 * F * 2 + F * NCP * 2
                      + NCP * 4 + B_pad * NCP * 4)

    out = pl.pallas_call(
        _cnn_kernel,
        out_shape=jax.ShapeDtypeStruct((B_pad, NCP), jnp.float32),
        grid=(grid,),
        in_specs=[
            pl.BlockSpec((TB, L_pad), lambda b: (b, 0)),       # per-tile input slab
            pl.BlockSpec((L_pad, 2 * F), lambda b: (0, 0)),    # [A_even|A_odd] + bias row
            pl.BlockSpec((F, NCP), lambda b: (0, 0)),          # fc weight^T (bf16, padded)
            pl.BlockSpec((1, NCP), lambda b: (0, 0)),          # fc bias (padded)
        ],
        out_specs=pl.BlockSpec((TB, NCP), lambda b: (b, 0)),
        compiler_params=pltpu.CompilerParams(
            dimension_semantics=("parallel",)),
        cost_estimate=pl.CostEstimate(
            flops=flops, transcendentals=0, bytes_accessed=bytes_accessed),
    )(x_pad, A, fwt, fb)
    return out[:B, :NC]


def reference_forward(x, conv_w, conv_b, fc_w, fc_b):
    """Pure-JAX reference mirroring the PyTorch forward."""
    B, L = x.shape
    C, _, K = conv_w.shape
    Lc = L - K + 1
    P = Lc // 2
    cols = jnp.stack([x[:, k:k + Lc] for k in range(K)], axis=-1)      # (B, Lc, K)
    conv = jnp.einsum('blk,ck->bcl', cols, conv_w[:, 0, :]) + conv_b[None, :, None]
    act = jnp.maximum(conv, 0.0)
    pooled = jnp.max(act[:, :, :2 * P].reshape(B, C, P, 2), axis=-1)   # (B, C, P)
    flat = pooled.reshape(B, C * P)
    return flat @ fc_w.T + fc_b[None, :]


if __name__ == "__main__":
    # input_size must satisfy 32 * ((input_size - 2) // 2) == 32*32  ->  66
    input_size = 66
    num_classes = 10
    batch = 2

    key = jax.random.PRNGKey(0)
    kx, kcw, kcb, kfw, kfb = jax.random.split(key, 5)
    x = jax.random.normal(kx, (batch, input_size), jnp.float32)
    conv_w = jax.random.normal(kcw, (32, 1, 3), jnp.float32) * 0.1
    conv_b = jax.random.normal(kcb, (32,), jnp.float32) * 0.1
    fc_w = jax.random.normal(kfw, (num_classes, 32 * 32), jnp.float32) * 0.05
    fc_b = jax.random.normal(kfb, (num_classes,), jnp.float32) * 0.05

    out = jax.block_until_ready(
        cnn_multiclass_forward(x, conv_w, conv_b, fc_w, fc_b))

    ref = reference_forward(x, conv_w, conv_b, fc_w, fc_b)
    assert out.shape == (batch, num_classes)
    if not jnp.allclose(out, ref, rtol=2e-2, atol=2e-2):
        raise AssertionError(
            f"mismatch vs reference, max abs diff = {jnp.max(jnp.abs(out - ref))}")
    print("KERNEL_OK")
</pallas_src>

<mosaic_0001>
module attributes {stable_mosaic.version = 11 : i64} {
  func.func @_cnn_kernel(%arg0: i32, %arg1: memref<8x128xbf16, #tpu.memory_space<vmem>>, %arg2: memref<128x2048xbf16, #tpu.memory_space<vmem>>, %arg3: memref<1024x128xbf16, #tpu.memory_space<vmem>>, %arg4: memref<1x128xf32, #tpu.memory_space<vmem>>, %arg5: memref<8x128xf32, #tpu.memory_space<vmem>>) attributes {dimension_semantics = [#tpu.dimension_semantics<parallel>], iteration_bounds = array<i64: 1>, scalar_prefetch = 0 : i64, scratch_operands = 0 : i64, tpu.core_type = #tpu.core_type<tc>, window_params = [{transform_indices = @transform_0, window_bounds = array<i64: 8, 128>}, {pipeline_mode = #tpu.pipeline_mode<synchronous>, transform_indices = @transform_1, window_bounds = array<i64: 128, 2048>}, {pipeline_mode = #tpu.pipeline_mode<synchronous>, transform_indices = @transform_2, window_bounds = array<i64: 1024, 128>}, {pipeline_mode = #tpu.pipeline_mode<synchronous>, transform_indices = @transform_3, window_bounds = array<i64: 1, 128>}, {transform_indices = @transform_4, window_bounds = array<i64: 8, 128>}]} {
    %c0 = arith.constant 0 : index
    %c0_0 = arith.constant 0 : index
    %0 = vector.load %arg1[%c0, %c0_0] : memref<8x128xbf16, #tpu.memory_space<vmem>>, vector<8x128xbf16>
    %c0_1 = arith.constant 0 : index
    %c0_2 = arith.constant 0 : index
    %1 = vector.load %arg2[%c0_1, %c0_2] : memref<128x2048xbf16, #tpu.memory_space<vmem>>, vector<128x2048xbf16>
    %cst = arith.constant dense<0.000000e+00> : vector<8x2048xf32>
    %2 = tpu.matmul %0, %1, %cst {dimension_numbers = #tpu.dot_dimension_numbers<[1], [0], [0], [1], [0, 0, 1, 1], [], []>} : vector<8x128xbf16>, vector<128x2048xbf16>, vector<8x2048xf32> -> vector<8x2048xf32>
    %3 = vector.extract_strided_slice %2 {offsets = [0, 0], sizes = [8, 1024], strides = [1, 1]} : vector<8x2048xf32> to vector<8x1024xf32>
    %4 = vector.extract_strided_slice %2 {offsets = [0, 1024], sizes = [8, 1024], strides = [1, 1]} : vector<8x2048xf32> to vector<8x1024xf32>
    %5 = arith.maximumf %3, %4 : vector<8x1024xf32>
    %cst_3 = arith.constant 0.000000e+00 : f32
    %6 = vector.broadcast %cst_3 : f32 to vector<8x1024xf32>
    %7 = arith.maximumf %5, %6 : vector<8x1024xf32>
    %8 = arith.truncf %7 : vector<8x1024xf32> to vector<8x1024xbf16>
    %c0_4 = arith.constant 0 : index
    %c0_5 = arith.constant 0 : index
    %9 = vector.load %arg3[%c0_4, %c0_5] : memref<1024x128xbf16, #tpu.memory_space<vmem>>, vector<1024x128xbf16>
    %cst_6 = arith.constant dense<0.000000e+00> : vector<8x128xf32>
    %10 = tpu.matmul %8, %9, %cst_6 {dimension_numbers = #tpu.dot_dimension_numbers<[1], [0], [0], [1], [0, 0, 1, 1], [], []>} : vector<8x1024xbf16>, vector<1024x128xbf16>, vector<8x128xf32> -> vector<8x128xf32>
    %c0_7 = arith.constant 0 : index
    %c0_8 = arith.constant 0 : index
    %11 = vector.load %arg4[%c0_7, %c0_8] : memref<1x128xf32, #tpu.memory_space<vmem>>, vector<1x128xf32>
    %12 = vector.broadcast %11 : vector<1x128xf32> to vector<8x128xf32>
    %13 = arith.addf %10, %12 : vector<8x128xf32>
    %c0_9 = arith.constant 0 : index
    %c0_10 = arith.constant 0 : index
    %14 = vector.load %arg5[%c0_9, %c0_10] : memref<8x128xf32, #tpu.memory_space<vmem>>, vector<8x128xf32>
    tpu.vector_store %arg5[%c0_9, %c0_10], %13 {strides = array<i32>} : memref<8x128xf32, #tpu.memory_space<vmem>>, vector<8x128xf32>,
    return
  }
  func.func @transform_0(%arg0: i32) -> (i32, i32) {
    %c0_i32 = arith.constant 0 : i32
    %c0_i32_0 = arith.constant 0 : i32
    return %arg0, %c0_i32 : i32, i32
  }
  func.func @transform_1(%arg0: i32) -> (i32, i32) {
    %c0_i32 = arith.constant 0 : i32
    %c0_i32_0 = arith.constant 0 : i32
    %c0_i32_1 = arith.constant 0 : i32
    return %c0_i32, %c0_i32_0 : i32, i32
  }
  func.func @transform_2(%arg0: i32) -> (i32, i32) {
    %c0_i32 = arith.constant 0 : i32
    %c0_i32_0 = arith.constant 0 : i32
    %c0_i32_1 = arith.constant 0 : i32
    return %c0_i32, %c0_i32_0 : i32, i32
  }
  func.func @transform_3(%arg0: i32) -> (i32, i32) {
    %c0_i32 = arith.constant 0 : i32
    %c0_i32_0 = arith.constant 0 : i32
    %c0_i32_1 = arith.constant 0 : i32
    return %c0_i32, %c0_i32_0 : i32, i32
  }
  func.func @transform_4(%arg0: i32) -> (i32, i32) {
    %c0_i32 = arith.constant 0 : i32
    %c0_i32_0 = arith.constant 0 : i32
    return %arg0, %c0_i32 : i32, i32
  }
}

</mosaic_0001>

<llo_original>
// kernel: cnn_multiclass_forward.1
$region0: #{cnn_multiclass_forward.1}
  #allocation0 [shape = 'u32[]', space=smem, size = 0x4, offset = 0x4, fixed_abs, tag = 'smem constant byte address 0x4 - core index']
  #allocation1 [shape = 'u32[72,128]{1,0:T(1,128)}', space=vmem, size = 0x9000, scoped, tag = 'internal scratch']
  %s0 = inlined_call_operand.vmem [shape: bf16[8,128], index: 0, kind: input, shape index: {}]
  %s1 = inlined_call_operand.vmem [shape: bf16[128,2048], index: 1, kind: input, shape index: {}]
  %s2 = inlined_call_operand.vmem [shape: bf16[1024,128], index: 2, kind: input, shape index: {}]
  %s3 = inlined_call_operand.vmem [shape: f32[1,128], index: 3, kind: input, shape index: {}]
  %s4 = inlined_call_operand.vmem [shape: f32[8,128], index: 4, kind: output, shape index: {}]
  %s5 = sld [smem:[#allocation0]]
  $region26: #{cnn_multiclass_forward.1} parent=0
    _
  %s7 = ssub.s32 1, %s5
  %s8 = scalar_select 0, %s7, %s5
  // Predicated region
  $region2: #{cnn_multiclass_forward.1} parent=0 // pred_check
    _
  $region3: #{cnn_multiclass_forward.1} parent=0 // pred_check_branch
    %10 = sbr.rel (0) target = $region5
  $region4: #{cnn_multiclass_forward.1} parent=0 // pred_region
    _
  $region5: #{cnn_multiclass_forward.1} parent=0 // pred_fallthru
    _
  // Predicated region
  $region6: #{cnn_multiclass_forward.1} parent=0 // pred_check
    _
  $region7: #{cnn_multiclass_forward.1} parent=0 // pred_check_branch
    %12 = sbr.rel (0) target = $region9
  $region8: #{cnn_multiclass_forward.1} parent=0 // pred_region
    _
  $region9: #{cnn_multiclass_forward.1} parent=0 // pred_fallthru
    _
  // Predicated region
  $region10: #{cnn_multiclass_forward.1} parent=0 // pred_check
    _
  $region11: #{cnn_multiclass_forward.1} parent=0 // pred_check_branch
    %14 = sbr.rel (0) target = $region13
  $region12: #{cnn_multiclass_forward.1} parent=0 // pred_region
    _
  $region13: #{cnn_multiclass_forward.1} parent=0 // pred_fallthru
    _
  // Predicated region
  $region14: #{cnn_multiclass_forward.1} parent=0 // pred_check
    _
  $region15: #{cnn_multiclass_forward.1} parent=0 // pred_check_branch
    %16 = sbr.rel (0) target = $region17
  $region16: #{cnn_multiclass_forward.1} parent=0 // pred_region
    _
  $region17: #{cnn_multiclass_forward.1} parent=0 // pred_fallthru
    _
  %v17 = vld [vmem:[%s0] sm:$0xf]
  %v18 = vld [vmem:[%s1] sm:$0xff]
  %v19 = vld [vmem:[%s1 + $0x8] sm:$0xff]
  %v20 = vld [vmem:[%s1 + $0x10] sm:$0xff]
  %v21 = vld [vmem:[%s1 + $0x18] sm:$0xff]
  %v22 = vld [vmem:[%s1 + $0x20] sm:$0xff]
  %v23 = vld [vmem:[%s1 + $0x28] sm:$0xff]
  %v24 = vld [vmem:[%s1 + $0x30] sm:$0xff]
  %v25 = vld [vmem:[%s1 + $0x38] sm:$0xff]
  %v26 = vld [vmem:[%s1 + $0x40] sm:$0xff]
  %v27 = vld [vmem:[%s1 + $0x48] sm:$0xff]
  %v28 = vld [vmem:[%s1 + $0x50] sm:$0xff]
  %v29 = vld [vmem:[%s1 + $0x58] sm:$0xff]
  %v30 = vld [vmem:[%s1 + $0x60] sm:$0xff]
  %v31 = vld [vmem:[%s1 + $0x68] sm:$0xff]
  %v32 = vld [vmem:[%s1 + $0x70] sm:$0xff]
  %v33 = vld [vmem:[%s1 + $0x78] sm:$0xff]
  %v34 = vld [vmem:[%s1 + $0x80] sm:$0xff]
  %v35 = vld [vmem:[%s1 + $0x88] sm:$0xff]
  %v36 = vld [vmem:[%s1 + $0x90] sm:$0xff]
  %v37 = vld [vmem:[%s1 + $0x98] sm:$0xff]
  %v38 = vld [vmem:[%s1 + $0xa0] sm:$0xff]
  %v39 = vld [vmem:[%s1 + $0xa8] sm:$0xff]
  %v40 = vld [vmem:[%s1 + $0xb0] sm:$0xff]
  %v41 = vld [vmem:[%s1 + $0xb8] sm:$0xff]
  %v42 = vld [vmem:[%s1 + $0xc0] sm:$0xff]
  %v43 = vld [vmem:[%s1 + $0xc8] sm:$0xff]
  %v44 = vld [vmem:[%s1 + $0xd0] sm:$0xff]
  %v45 = vld [vmem:[%s1 + $0xd8] sm:$0xff]
  %v46 = vld [vmem:[%s1 + $0xe0] sm:$0xff]
  %v47 = vld [vmem:[%s1 + $0xe8] sm:$0xff]
  %v48 = vld [vmem:[%s1 + $0xf0] sm:$0xff]
  %v49 = vld [vmem:[%s1 + $0xf8] sm:$0xff]
  %v50 = vld [vmem:[%s1 + $0x100] sm:$0xff]
  %v51 = vld [vmem:[%s1 + $0x108] sm:$0xff]
  %v52 = vld [vmem:[%s1 + $0x110] sm:$0xff]
  %v53 = vld [vmem:[%s1 + $0x118] sm:$0xff]
  %v54 = vld [vmem:[%s1 + $0x120] sm:$0xff]
  %v55 = vld [vmem:[%s1 + $0x128] sm:$0xff]
  %v56 = vld [vmem:[%s1 + $0x130] sm:$0xff]
  %v57 = vld [vmem:[%s1 + $0x138] sm:$0xff]
  %v58 = vld [vmem:[%s1 + $0x140] sm:$0xff]
  %v59 = vld [vmem:[%s1 + $0x148] sm:$0xff]
  %v60 = vld [vmem:[%s1 + $0x150] sm:$0xff]
  %v61 = vld [vmem:[%s1 + $0x158] sm:$0xff]
  %v62 = vld [vmem:[%s1 + $0x160] sm:$0xff]
  %v63 = vld [vmem:[%s1 + $0x168] sm:$0xff]
  %v64 = vld [vmem:[%s1 + $0x170] sm:$0xff]
  %v65 = vld [vmem:[%s1 + $0x178] sm:$0xff]
  %v66 = vld [vmem:[%s1 + $0x180] sm:$0xff]
  %v67 = vld [vmem:[%s1 + $0x188] sm:$0xff]
  %v68 = vld [vmem:[%s1 + $0x190] sm:$0xff]
  %v69 = vld [vmem:[%s1 + $0x198] sm:$0xff]
  %v70 = vld [vmem:[%s1 + $0x1a0] sm:$0xff]
  %v71 = vld [vmem:[%s1 + $0x1a8] sm:$0xff]
  %v72 = vld [vmem:[%s1 + $0x1b0] sm:$0xff]
  %v73 = vld [vmem:[%s1 + $0x1b8] sm:$0xff]
  %v74 = vld [vmem:[%s1 + $0x1c0] sm:$0xff]
  %v75 = vld [vmem:[%s1 + $0x1c8] sm:$0xff]
  %v76 = vld [vmem:[%s1 + $0x1d0] sm:$0xff]
  %v77 = vld [vmem:[%s1 + $0x1d8] sm:$0xff]
  %v78 = vld [vmem:[%s1 + $0x1e0] sm:$0xff]
  %v79 = vld [vmem:[%s1 + $0x1e8] sm:$0xff]
  %v80 = vld [vmem:[%s1 + $0x1f0] sm:$0xff]
  %v81 = vld [vmem:[%s1 + $0x1f8] sm:$0xff]
  %v82 = vld [vmem:[%s1 + $0x200] sm:$0xff]
  %v83 = vld [vmem:[%s1 + $0x208] sm:$0xff]
  %v84 = vld [vmem:[%s1 + $0x210] sm:$0xff]
  %v85 = vld [vmem:[%s1 + $0x218] sm:$0xff]
  %v86 = vld [vmem:[%s1 + $0x220] sm:$0xff]
  %v87 = vld [vmem:[%s1 + $0x228] sm:$0xff]
  %v88 = vld [vmem:[%s1 + $0x230] sm:$0xff]
  %v89 = vld [vmem:[%s1 + $0x238] sm:$0xff]
  %v90 = vld [vmem:[%s1 + $0x240] sm:$0xff]
  %v91 = vld [vmem:[%s1 + $0x248] sm:$0xff]
  %v92 = vld [vmem:[%s1 + $0x250] sm:$0xff]
  %v93 = vld [vmem:[%s1 + $0x258] sm:$0xff]
  %v94 = vld [vmem:[%s1 + $0x260] sm:$0xff]
  %v95 = vld [vmem:[%s1 + $0x268] sm:$0xff]
  %v96 = vld [vmem:[%s1 + $0x270] sm:$0xff]
  %v97 = vld [vmem:[%s1 + $0x278] sm:$0xff]
  %v98 = vld [vmem:[%s1 + $0x280] sm:$0xff]
  %v99 = vld [vmem:[%s1 + $0x288] sm:$0xff]
  %v100 = vld [vmem:[%s1 + $0x290] sm:$0xff]
  %v101 = vld [vmem:[%s1 + $0x298] sm:$0xff]
  %v102 = vld [vmem:[%s1 + $0x2a0] sm:$0xff]
  %v103 = vld [vmem:[%s1 + $0x2a8] sm:$0xff]
  %v104 = vld [vmem:[%s1 + $0x2b0] sm:$0xff]
  %v105 = vld [vmem:[%s1 + $0x2b8] sm:$0xff]
  %v106 = vld [vmem:[%s1 + $0x2c0] sm:$0xff]
  %v107 = vld [vmem:[%s1 + $0x2c8] sm:$0xff]
  %v108 = vld [vmem:[%s1 + $0x2d0] sm:$0xff]
  %v109 = vld [vmem:[%s1 + $0x2d8] sm:$0xff]
  %v110 = vld [vmem:[%s1 + $0x2e0] sm:$0xff]
  %v111 = vld [vmem:[%s1 + $0x2e8] sm:$0xff]
  %v112 = vld [vmem:[%s1 + $0x2f0] sm:$0xff]
  %v113 = vld [vmem:[%s1 + $0x2f8] sm:$0xff]
  %v114 = vld [vmem:[%s1 + $0x300] sm:$0xff]
  %v115 = vld [vmem:[%s1 + $0x308] sm:$0xff]
  %v116 = vld [vmem:[%s1 + $0x310] sm:$0xff]
  %v117 = vld [vmem:[%s1 + $0x318] sm:$0xff]
  %v118 = vld [vmem:[%s1 + $0x320] sm:$0xff]
  %v119 = vld [vmem:[%s1 + $0x328] sm:$0xff]
  %v120 = vld [vmem:[%s1 + $0x330] sm:$0xff]
  %v121 = vld [vmem:[%s1 + $0x338] sm:$0xff]
  %v122 = vld [vmem:[%s1 + $0x340] sm:$0xff]
  %v123 = vld [vmem:[%s1 + $0x348] sm:$0xff]
  %v124 = vld [vmem:[%s1 + $0x350] sm:$0xff]
  %v125 = vld [vmem:[%s1 + $0x358] sm:$0xff]
  %v126 = vld [vmem:[%s1 + $0x360] sm:$0xff]
  %v127 = vld [vmem:[%s1 + $0x368] sm:$0xff]
  %v128 = vld [vmem:[%s1 + $0x370] sm:$0xff]
  %v129 = vld [vmem:[%s1 + $0x378] sm:$0xff]
  %v130 = vld [vmem:[%s1 + $0x380] sm:$0xff]
  %v131 = vld [vmem:[%s1 + $0x388] sm:$0xff]
  %v132 = vld [vmem:[%s1 + $0x390] sm:$0xff]
  %v133 = vld [vmem:[%s1 + $0x398] sm:$0xff]
  %v134 = vld [vmem:[%s1 + $0x3a0] sm:$0xff]
  %v135 = vld [vmem:[%s1 + $0x3a8] sm:$0xff]
  %v136 = vld [vmem:[%s1 + $0x3b0] sm:$0xff]
  %v137 = vld [vmem:[%s1 + $0x3b8] sm:$0xff]
  %v138 = vld [vmem:[%s1 + $0x3c0] sm:$0xff]
  %v139 = vld [vmem:[%s1 + $0x3c8] sm:$0xff]
  %v140 = vld [vmem:[%s1 + $0x3d0] sm:$0xff]
  %v141 = vld [vmem:[%s1 + $0x3d8] sm:$0xff]
  %v142 = vld [vmem:[%s1 + $0x3e0] sm:$0xff]
  %v143 = vld [vmem:[%s1 + $0x3e8] sm:$0xff]
  %v144 = vld [vmem:[%s1 + $0x3f0] sm:$0xff]
  %v145 = vld [vmem:[%s1 + $0x3f8] sm:$0xff]
  %v274 = vunpack.c.l.b16 %v18
  %v275 = vunpack.c.h.b16 %v18
  %v276 = vunpack.c.l.b16 %v19
  %v277 = vunpack.c.h.b16 %v19
  %v278 = vunpack.c.l.b16 %v20
  %v279 = vunpack.c.h.b16 %v20
  %v280 = vunpack.c.l.b16 %v21
  %v281 = vunpack.c.h.b16 %v21
  %v282 = vunpack.c.l.b16 %v22
  %v283 = vunpack.c.h.b16 %v22
  %v284 = vunpack.c.l.b16 %v23
  %v285 = vunpack.c.h.b16 %v23
  %v286 = vunpack.c.l.b16 %v24
  %v287 = vunpack.c.h.b16 %v24
  %v288 = vunpack.c.l.b16 %v25
  %v289 = vunpack.c.h.b16 %v25
  %v290 = vunpack.c.l.b16 %v26
  %v291 = vunpack.c.h.b16 %v26
  %v292 = vunpack.c.l.b16 %v27
  %v293 = vunpack.c.h.b16 %v27
  %v294 = vunpack.c.l.b16 %v28
  %v295 = vunpack.c.h.b16 %v28
  %v296 = vunpack.c.l.b16 %v29
  %v297 = vunpack.c.h.b16 %v29
  %v298 = vunpack.c.l.b16 %v30
  %v299 = vunpack.c.h.b16 %v30
  %v300 = vunpack.c.l.b16 %v31
  %v301 = vunpack.c.h.b16 %v31
  %v302 = vunpack.c.l.b16 %v32
  %v303 = vunpack.c.h.b16 %v32
  %v304 = vunpack.c.l.b16 %v33
  %v305 = vunpack.c.h.b16 %v33
  %v306 = vunpack.c.l.b16 %v34
  %v307 = vunpack.c.h.b16 %v34
  %v308 = vunpack.c.l.b16 %v35
  %v309 = vunpack.c.h.b16 %v35
  %v310 = vunpack.c.l.b16 %v36
  %v311 = vunpack.c.h.b16 %v36
  %v312 = vunpack.c.l.b16 %v37
  %v313 = vunpack.c.h.b16 %v37
  %v314 = vunpack.c.l.b16 %v38
  %v315 = vunpack.c.h.b16 %v38
  %v316 = vunpack.c.l.b16 %v39
  %v317 = vunpack.c.h.b16 %v39
  %v318 = vunpack.c.l.b16 %v40
  %v319 = vunpack.c.h.b16 %v40
  %v320 = vunpack.c.l.b16 %v41
  %v321 = vunpack.c.h.b16 %v41
  %v322 = vunpack.c.l.b16 %v42
  %v323 = vunpack.c.h.b16 %v42
  %v324 = vunpack.c.l.b16 %v43
  %v325 = vunpack.c.h.b16 %v43
  %v326 = vunpack.c.l.b16 %v44
  %v327 = vunpack.c.h.b16 %v44
  %v328 = vunpack.c.l.b16 %v45
  %v329 = vunpack.c.h.b16 %v45
  %v330 = vunpack.c.l.b16 %v46
  %v331 = vunpack.c.h.b16 %v46
  %v332 = vunpack.c.l.b16 %v47
  %v333 = vunpack.c.h.b16 %v47
  %v334 = vunpack.c.l.b16 %v48
  %v335 = vunpack.c.h.b16 %v48
  %v336 = vunpack.c.l.b16 %v49
  %v337 = vunpack.c.h.b16 %v49
  %v338 = vunpack.c.l.b16 %v50
  %v339 = vunpack.c.h.b16 %v50
  %v340 = vunpack.c.l.b16 %v51
  %v341 = vunpack.c.h.b16 %v51
  %v342 = vunpack.c.l.b16 %v52
  %v343 = vunpack.c.h.b16 %v52
  %v344 = vunpack.c.l.b16 %v53
  %v345 = vunpack.c.h.b16 %v53
  %v346 = vunpack.c.l.b16 %v54
  %v347 = vunpack.c.h.b16 %v54
  %v348 = vunpack.c.l.b16 %v55
  %v349 = vunpack.c.h.b16 %v55
  %v350 = vunpack.c.l.b16 %v56
  %v351 = vunpack.c.h.b16 %v56
  %v352 = vunpack.c.l.b16 %v57
  %v353 = vunpack.c.h.b16 %v57
  %v354 = vunpack.c.l.b16 %v58
  %v355 = vunpack.c.h.b16 %v58
  %v356 = vunpack.c.l.b16 %v59
  %v357 = vunpack.c.h.b16 %v59
  %v358 = vunpack.c.l.b16 %v60
  %v359 = vunpack.c.h.b16 %v60
  %v360 = vunpack.c.l.b16 %v61
  %v361 = vunpack.c.h.b16 %v61
  %v362 = vunpack.c.l.b16 %v62
  %v363 = vunpack.c.h.b16 %v62
  %v364 = vunpack.c.l.b16 %v63
  %v365 = vunpack.c.h.b16 %v63
  %v366 = vunpack.c.l.b16 %v64
  %v367 = vunpack.c.h.b16 %v64
  %v368 = vunpack.c.l.b16 %v65
  %v369 = vunpack.c.h.b16 %v65
  %v370 = vunpack.c.l.b16 %v66
  %v371 = vunpack.c.h.b16 %v66
  %v372 = vunpack.c.l.b16 %v67
  %v373 = vunpack.c.h.b16 %v67
  %v374 = vunpack.c.l.b16 %v68
  %v375 = vunpack.c.h.b16 %v68
  %v376 = vunpack.c.l.b16 %v69
  %v377 = vunpack.c.h.b16 %v69
  %v378 = vunpack.c.l.b16 %v70
  %v379 = vunpack.c.h.b16 %v70
  %v380 = vunpack.c.l.b16 %v71
  %v381 = vunpack.c.h.b16 %v71
  %v382 = vunpack.c.l.b16 %v72
  %v383 = vunpack.c.h.b16 %v72
  %v384 = vunpack.c.l.b16 %v73
  %v385 = vunpack.c.h.b16 %v73
  %v386 = vunpack.c.l.b16 %v74
  %v387 = vunpack.c.h.b16 %v74
  %v388 = vunpack.c.l.b16 %v75
  %v389 = vunpack.c.h.b16 %v75
  %v390 = vunpack.c.l.b16 %v76
  %v391 = vunpack.c.h.b16 %v76
  %v392 = vunpack.c.l.b16 %v77
  %v393 = vunpack.c.h.b16 %v77
  %v394 = vunpack.c.l.b16 %v78
  %v395 = vunpack.c.h.b16 %v78
  %v396 = vunpack.c.l.b16 %v79
  %v397 = vunpack.c.h.b16 %v79
  %v398 = vunpack.c.l.b16 %v80
  %v399 = vunpack.c.h.b16 %v80
  %v400 = vunpack.c.l.b16 %v81
  %v401 = vunpack.c.h.b16 %v81
  %v402 = vunpack.c.l.b16 %v82
  %v403 = vunpack.c.h.b16 %v82
  %v404 = vunpack.c.l.b16 %v83
  %v405 = vunpack.c.h.b16 %v83
  %v406 = vunpack.c.l.b16 %v84
  %v407 = vunpack.c.h.b16 %v84
  %v408 = vunpack.c.l.b16 %v85
  %v409 = vunpack.c.h.b16 %v85
  %v410 = vunpack.c.l.b16 %v86
  %v411 = vunpack.c.h.b16 %v86
  %v412 = vunpack.c.l.b16 %v87
  %v413 = vunpack.c.h.b16 %v87
  %v414 = vunpack.c.l.b16 %v88
  %v415 = vunpack.c.h.b16 %v88
  %v416 = vunpack.c.l.b16 %v89
  %v417 = vunpack.c.h.b16 %v89
  %v418 = vunpack.c.l.b16 %v90
  %v419 = vunpack.c.h.b16 %v90
  %v420 = vunpack.c.l.b16 %v91
  %v421 = vunpack.c.h.b16 %v91
  %v422 = vunpack.c.l.b16 %v92
  %v423 = vunpack.c.h.b16 %v92
  %v424 = vunpack.c.l.b16 %v93
  %v425 = vunpack.c.h.b16 %v93
  %v426 = vunpack.c.l.b16 %v94
  %v427 = vunpack.c.h.b16 %v94
  %v428 = vunpack.c.l.b16 %v95
  %v429 = vunpack.c.h.b16 %v95
  %v430 = vunpack.c.l.b16 %v96
  %v431 = vunpack.c.h.b16 %v96
  %v432 = vunpack.c.l.b16 %v97
  %v433 = vunpack.c.h.b16 %v97
  %v434 = vunpack.c.l.b16 %v98
  %v435 = vunpack.c.h.b16 %v98
  %v436 = vunpack.c.l.b16 %v99
  %v437 = vunpack.c.h.b16 %v99
  %v438 = vunpack.c.l.b16 %v100
  %v439 = vunpack.c.h.b16 %v100
  %v440 = vunpack.c.l.b16 %v101
  %v441 = vunpack.c.h.b16 %v101
  %v442 = vunpack.c.l.b16 %v102
  %v443 = vunpack.c.h.b16 %v102
  %v444 = vunpack.c.l.b16 %v103
  %v445 = vunpack.c.h.b16 %v103
  %v446 = vunpack.c.l.b16 %v104
  %v447 = vunpack.c.h.b16 %v104
  %v448 = vunpack.c.l.b16 %v105
  %v449 = vunpack.c.h.b16 %v105
  %v450 = vunpack.c.l.b16 %v106
  %v451 = vunpack.c.h.b16 %v106
  %v452 = vunpack.c.l.b16 %v107
  %v453 = vunpack.c.h.b16 %v107
  %v454 = vunpack.c.l.b16 %v108
  %v455 = vunpack.c.h.b16 %v108
  %v456 = vunpack.c.l.b16 %v109
  %v457 = vunpack.c.h.b16 %v109
  %v458 = vunpack.c.l.b16 %v110
  %v459 = vunpack.c.h.b16 %v110
  %v460 = vunpack.c.l.b16 %v111
  %v461 = vunpack.c.h.b16 %v111
  %v462 = vunpack.c.l.b16 %v112
  %v463 = vunpack.c.h.b16 %v112
  %v464 = vunpack.c.l.b16 %v113
  %v465 = vunpack.c.h.b16 %v113
  %v466 = vunpack.c.l.b16 %v114
  %v467 = vunpack.c.h.b16 %v114
  %v468 = vunpack.c.l.b16 %v115
  %v469 = vunpack.c.h.b16 %v115
  %v470 = vunpack.c.l.b16 %v116
  %v471 = vunpack.c.h.b16 %v116
  %v472 = vunpack.c.l.b16 %v117
  %v473 = vunpack.c.h.b16 %v117
  %v474 = vunpack.c.l.b16 %v118
  %v475 = vunpack.c.h.b16 %v118
  %v476 = vunpack.c.l.b16 %v119
  %v477 = vunpack.c.h.b16 %v119
  %v478 = vunpack.c.l.b16 %v120
  %v479 = vunpack.c.h.b16 %v120
  %v480 = vunpack.c.l.b16 %v121
  %v481 = vunpack.c.h.b16 %v121
  %v482 = vunpack.c.l.b16 %v122
  %v483 = vunpack.c.h.b16 %v122
  %v484 = vunpack.c.l.b16 %v123
  %v485 = vunpack.c.h.b16 %v123
  %v486 = vunpack.c.l.b16 %v124
  %v487 = vunpack.c.h.b16 %v124
  %v488 = vunpack.c.l.b16 %v125
  %v489 = vunpack.c.h.b16 %v125
  %v490 = vunpack.c.l.b16 %v126
  %v491 = vunpack.c.h.b16 %v126
  %v492 = vunpack.c.l.b16 %v127
  %v493 = vunpack.c.h.b16 %v127
  %v494 = vunpack.c.l.b16 %v128
  %v495 = vunpack.c.h.b16 %v128
  %v496 = vunpack.c.l.b16 %v129
  %v497 = vunpack.c.h.b16 %v129
  %v498 = vunpack.c.l.b16 %v130
  %v499 = vunpack.c.h.b16 %v130
  %v500 = vunpack.c.l.b16 %v131
  %v501 = vunpack.c.h.b16 %v131
  %v502 = vunpack.c.l.b16 %v132
  %v503 = vunpack.c.h.b16 %v132
  %v504 = vunpack.c.l.b16 %v133
  %v505 = vunpack.c.h.b16 %v133
  %v506 = vunpack.c.l.b16 %v134
  %v507 = vunpack.c.h.b16 %v134
  %v508 = vunpack.c.l.b16 %v135
  %v509 = vunpack.c.h.b16 %v135
  %v510 = vunpack.c.l.b16 %v136
  %v511 = vunpack.c.h.b16 %v136
  %v512 = vunpack.c.l.b16 %v137
  %v513 = vunpack.c.h.b16 %v137
  %v514 = vunpack.c.l.b16 %v138
  %v515 = vunpack.c.h.b16 %v138
  %v516 = vunpack.c.l.b16 %v139
  %v517 = vunpack.c.h.b16 %v139
  %v518 = vunpack.c.l.b16 %v140
  %v519 = vunpack.c.h.b16 %v140
  %v520 = vunpack.c.l.b16 %v141
  %v521 = vunpack.c.h.b16 %v141
  %v522 = vunpack.c.l.b16 %v142
  %v523 = vunpack.c.h.b16 %v142
  %v524 = vunpack.c.l.b16 %v143
  %v525 = vunpack.c.h.b16 %v143
  %v526 = vunpack.c.l.b16 %v144
  %v527 = vunpack.c.h.b16 %v144
  %v528 = vunpack.c.l.b16 %v145
  %v529 = vunpack.c.h.b16 %v145
  %v530 = vpack.c.b16 %v290, %v274
  %v531 = vpack.c.b16 %v291, %v275
  %v532 = vpack.c.b16 %v292, %v276
  %v533 = vpack.c.b16 %v293, %v277
  %v534 = vpack.c.b16 %v294, %v278
  %v535 = vpack.c.b16 %v295, %v279
  %v536 = vpack.c.b16 %v296, %v280
  %v537 = vpack.c.b16 %v297, %v281
  %v538 = vpack.c.b16 %v298, %v282
  %v539 = vpack.c.b16 %v299, %v283
  %v540 = vpack.c.b16 %v300, %v284
  %v541 = vpack.c.b16 %v301, %v285
  %v542 = vpack.c.b16 %v302, %v286
  %v543 = vpack.c.b16 %v303, %v287
  %v544 = vpack.c.b16 %v304, %v288
  %v545 = vpack.c.b16 %v305, %v289
  %v546 = vpack.c.b16 %v322, %v306
  %v547 = vpack.c.b16 %v323, %v307
  %v548 = vpack.c.b16 %v324, %v308
  %v549 = vpack.c.b16 %v325, %v309
  %v550 = vpack.c.b16 %v326, %v310
  %v551 = vpack.c.b16 %v327, %v311
  %v552 = vpack.c.b16 %v328, %v312
  %v553 = vpack.c.b16 %v329, %v313
  %v554 = vpack.c.b16 %v330, %v314
  %v555 = vpack.c.b16 %v331, %v315
  %v556 = vpack.c.b16 %v332, %v316
  %v557 = vpack.c.b16 %v333, %v317
  %v558 = vpack.c.b16 %v334, %v318
  %v559 = vpack.c.b16 %v335, %v319
  %v560 = vpack.c.b16 %v336, %v320
  %v561 = vpack.c.b16 %v337, %v321
  %v562 = vpack.c.b16 %v354, %v338
  %v563 = vpack.c.b16 %v355, %v339
  %v564 = vpack.c.b16 %v356, %v340
  %v565 = vpack.c.b16 %v357, %v341
  %v566 = vpack.c.b16 %v358, %v342
  %v567 = vpack.c.b16 %v359, %v343
  %v568 = vpack.c.b16 %v360, %v344
  %v569 = vpack.c.b16 %v361, %v345
  %v570 = vpack.c.b16 %v362, %v346
  %v571 = vpack.c.b16 %v363, %v347
  %v572 = vpack.c.b16 %v364, %v348
  %v573 = vpack.c.b16 %v365, %v349
  %v574 = vpack.c.b16 %v366, %v350
  %v575 = vpack.c.b16 %v367, %v351
  %v576 = vpack.c.b16 %v368, %v352
  %v577 = vpack.c.b16 %v369, %v353
  %v578 = vpack.c.b16 %v386, %v370
  %v579 = vpack.c.b16 %v387, %v371
  %v580 = vpack.c.b16 %v388, %v372
  %v581 = vpack.c.b16 %v389, %v373
  %v582 = vpack.c.b16 %v390, %v374
  %v583 = vpack.c.b16 %v391, %v375
  %v584 = vpack.c.b16 %v392, %v376
  %v585 = vpack.c.b16 %v393, %v377
  %v586 = vpack.c.b16 %v394, %v378
  %v587 = vpack.c.b16 %v395, %v379
  %v588 = vpack.c.b16 %v396, %v380
  %v589 = vpack.c.b16 %v397, %v381
  %v590 = vpack.c.b16 %v398, %v382
  %v591 = vpack.c.b16 %v399, %v383
  %v592 = vpack.c.b16 %v400, %v384
  %v593 = vpack.c.b16 %v401, %v385
  %v594 = vpack.c.b16 %v418, %v402
  %v595 = vpack.c.b16 %v419, %v403
  %v596 = vpack.c.b16 %v420, %v404
  %v597 = vpack.c.b16 %v421, %v405
  %v598 = vpack.c.b16 %v422, %v406
  %v599 = vpack.c.b16 %v423, %v407
  %v600 = vpack.c.b16 %v424, %v408
  %v601 = vpack.c.b16 %v425, %v409
  %v602 = vpack.c.b16 %v426, %v410
  %v603 = vpack.c.b16 %v427, %v411
  %v604 = vpack.c.b16 %v428, %v412
  %v605 = vpack.c.b16 %v429, %v413
  %v606 = vpack.c.b16 %v430, %v414
  %v607 = vpack.c.b16 %v431, %v415
  %v608 = vpack.c.b16 %v432, %v416
  %v609 = vpack.c.b16 %v433, %v417
  %v610 = vpack.c.b16 %v450, %v434
  %v611 = vpack.c.b16 %v451, %v435
  %v612 = vpack.c.b16 %v452, %v436
  %v613 = vpack.c.b16 %v453, %v437
  %v614 = vpack.c.b16 %v454, %v438
  %v615 = vpack.c.b16 %v455, %v439
  %v616 = vpack.c.b16 %v456, %v440
  %v617 = vpack.c.b16 %v457, %v441
  %v618 = vpack.c.b16 %v458, %v442
  %v619 = vpack.c.b16 %v459, %v443
  %v620 = vpack.c.b16 %v460, %v444
  %v621 = vpack.c.b16 %v461, %v445
  %v622 = vpack.c.b16 %v462, %v446
  %v623 = vpack.c.b16 %v463, %v447
  %v624 = vpack.c.b16 %v464, %v448
  %v625 = vpack.c.b16 %v465, %v449
  %v626 = vpack.c.b16 %v482, %v466
  %v627 = vpack.c.b16 %v483, %v467
  %v628 = vpack.c.b16 %v484, %v468
  %v629 = vpack.c.b16 %v485, %v469
  %v630 = vpack.c.b16 %v486, %v470
  %v631 = vpack.c.b16 %v487, %v471
  %v632 = vpack.c.b16 %v488, %v472
  %v633 = vpack.c.b16 %v489, %v473
  %v634 = vpack.c.b16 %v490, %v474
  %v635 = vpack.c.b16 %v491, %v475
  %v636 = vpack.c.b16 %v492, %v476
  %v637 = vpack.c.b16 %v493, %v477
  %v638 = vpack.c.b16 %v494, %v478
  %v639 = vpack.c.b16 %v495, %v479
  %v640 = vpack.c.b16 %v496, %v480
  %v641 = vpack.c.b16 %v497, %v481
  %v642 = vpack.c.b16 %v514, %v498
  %v643 = vpack.c.b16 %v515, %v499
  %v644 = vpack.c.b16 %v516, %v500
  %v645 = vpack.c.b16 %v517, %v501
  %v646 = vpack.c.b16 %v518, %v502
  %v647 = vpack.c.b16 %v519, %v503
  %v648 = vpack.c.b16 %v520, %v504
  %v649 = vpack.c.b16 %v521, %v505
  %v650 = vpack.c.b16 %v522, %v506
  %v651 = vpack.c.b16 %v523, %v507
  %v652 = vpack.c.b16 %v524, %v508
  %v653 = vpack.c.b16 %v525, %v509
  %v654 = vpack.c.b16 %v526, %v510
  %v655 = vpack.c.b16 %v527, %v511
  %v656 = vpack.c.b16 %v528, %v512
  %v657 = vpack.c.b16 %v529, %v513
  %786 = vmatpush.bf16.msra.mxu0 %v642
  %787 = vmatpush.bf16.msra.mxu0 %v626
  %788 = vmatpush.bf16.msra.mxu0 %v610
  %789 = vmatpush.bf16.msra.mxu0 %v594
  %790 = vmatpush.bf16.msra.mxu0 %v578
  %791 = vmatpush.bf16.msra.mxu0 %v562
  %792 = vmatpush.bf16.msra.mxu0 %v546
  %793 = vmatpush.bf16.msra.mxu0 %v530
  %794 = vmatmul.bf16.gmra.mxu0 %v17
  %v795 = vpop.f32.mrf.mxu0
  %v796 = vadd.f32 0.0, %v795
  %v797 = vpop.f32.mrf.mxu0
  %798 = vdwg.mxu0
  %799 = vmatpush.bf16.msra.mxu0 %v643
  %800 = vmatpush.bf16.msra.mxu0 %v627
  %801 = vmatpush.bf16.msra.mxu0 %v611
  %802 = vmatpush.bf16.msra.mxu0 %v595
  %803 = vmatpush.bf16.msra.mxu0 %v579
  %804 = vmatpush.bf16.msra.mxu0 %v563
  %805 = vmatpush.bf16.msra.mxu0 %v547
  %806 = vmatpush.bf16.msra.mxu0 %v531
  %807 = vmatmul.bf16.gmra.mxu0 %v17
  %v808 = vpop.f32.mrf.mxu0
  %v809 = vadd.f32 0.0, %v808
  %v810 = vpop.f32.mrf.mxu0
  %811 = vdwg.mxu0
  %812 = vmatpush.bf16.msra.mxu0 %v644
  %813 = vmatpush.bf16.msra.mxu0 %v628
  %814 = vmatpush.bf16.msra.mxu0 %v612
  %815 = vmatpush.bf16.msra.mxu0 %v596
  %816 = vmatpush.bf16.msra.mxu0 %v580
  %817 = vmatpush.bf16.msra.mxu0 %v564
  %818 = vmatpush.bf16.msra.mxu0 %v548
  %819 = vmatpush.bf16.msra.mxu0 %v532
  %820 = vmatmul.bf16.gmra.mxu0 %v17
  %v821 = vpop.f32.mrf.mxu0
  %v822 = vadd.f32 0.0, %v821
  %v823 = vpop.f32.mrf.mxu0
  %824 = vdwg.mxu0
  %825 = vmatpush.bf16.msra.mxu0 %v645
  %826 = vmatpush.bf16.msra.mxu0 %v629
  %827 = vmatpush.bf16.msra.mxu0 %v613
  %828 = vmatpush.bf16.msra.mxu0 %v597
  %829 = vmatpush.bf16.msra.mxu0 %v581
  %830 = vmatpush.bf16.msra.mxu0 %v565
  %831 = vmatpush.bf16.msra.mxu0 %v549
  %832 = vmatpush.bf16.msra.mxu0 %v533
  %833 = vmatmul.bf16.gmra.mxu0 %v17
  %v834 = vpop.f32.mrf.mxu0
  %v835 = vadd.f32 0.0, %v834
  %v836 = vpop.f32.mrf.mxu0
  %837 = vdwg.mxu0
  %838 = vmatpush.bf16.msra.mxu0 %v646
  %839 = vmatpush.bf16.msra.mxu0 %v630
  %840 = vmatpush.bf16.msra.mxu0 %v614
  %841 = vmatpush.bf16.msra.mxu0 %v598
  %842 = vmatpush.bf16.msra.mxu0 %v582
  %843 = vmatpush.bf16.msra.mxu0 %v566
  %844 = vmatpush.bf16.msra.mxu0 %v550
  %845 = vmatpush.bf16.msra.mxu0 %v534
  %846 = vmatmul.bf16.gmra.mxu0 %v17
  %v847 = vpop.f32.mrf.mxu0
  %v848 = vadd.f32 0.0, %v847
  %v849 = vpop.f32.mrf.mxu0
  %850 = vdwg.mxu0
  %851 = vmatpush.bf16.msra.mxu0 %v647
  %852 = vmatpush.bf16.msra.mxu0 %v631
  %853 = vmatpush.bf16.msra.mxu0 %v615
  %854 = vmatpush.bf16.msra.mxu0 %v599
  %855 = vmatpush.bf16.msra.mxu0 %v583
  %856 = vmatpush.bf16.msra.mxu0 %v567
  %857 = vmatpush.bf16.msra.mxu0 %v551
  %858 = vmatpush.bf16.msra.mxu0 %v535
  %859 = vmatmul.bf16.gmra.mxu0 %v17
  %v860 = vpop.f32.mrf.mxu0
  %v861 = vadd.f32 0.0, %v860
  %v862 = vpop.f32.mrf.mxu0
  %863 = vdwg.mxu0
  %864 = vmatpush.bf16.msra.mxu0 %v648
  %865 = vmatpush.bf16.msra.mxu0 %v632
  %866 = vmatpush.bf16.msra.mxu0 %v616
  %867 = vmatpush.bf16.msra.mxu0 %v600
  %868 = vmatpush.bf16.msra.mxu0 %v584
  %869 = vmatpush.bf16.msra.mxu0 %v568
  %870 = vmatpush.bf16.msra.mxu0 %v552
  %871 = vmatpush.bf16.msra.mxu0 %v536
  %872 = vmatmul.bf16.gmra.mxu0 %v17
  %v873 = vpop.f32.mrf.mxu0
  %v874 = vadd.f32 0.0, %v873
  %v875 = vpop.f32.mrf.mxu0
  %876 = vdwg.mxu0
  %877 = vmatpush.bf16.msra.mxu0 %v649
  %878 = vmatpush.bf16.msra.mxu0 %v633
  %879 = vmatpush.bf16.msra.mxu0 %v617
  %880 = vmatpush.bf16.msra.mxu0 %v601
  %881 = vmatpush.bf16.msra.mxu0 %v585
  %882 = vmatpush.bf16.msra.mxu0 %v569
  %883 = vmatpush.bf16.msra.mxu0 %v553
  %884 = vmatpush.bf16.msra.mxu0 %v537
  %885 = vmatmul.bf16.gmra.mxu0 %v17
  %v886 = vpop.f32.mrf.mxu0
  %v887 = vadd.f32 0.0, %v886
  %v888 = vpop.f32.mrf.mxu0
  %889 = vdwg.mxu0
  %890 = vmatpush.bf16.msra.mxu0 %v650
  %891 = vmatpush.bf16.msra.mxu0 %v634
  %892 = vmatpush.bf16.msra.mxu0 %v618
  %893 = vmatpush.bf16.msra.mxu0 %v602
  %894 = vmatpush.bf16.msra.mxu0 %v586
  %895 = vmatpush.bf16.msra.mxu0 %v570
  %896 = vmatpush.bf16.msra.mxu0 %v554
  %897 = vmatpush.bf16.msra.mxu0 %v538
  %898 = vmatmul.bf16.gmra.mxu0 %v17
  %v899 = vpop.f32.mrf.mxu0
  %v900 = vadd.f32 0.0, %v899
  %v901 = vpop.f32.mrf.mxu0
  %902 = vdwg.mxu0
  %903 = vmatpush.bf16.msra.mxu0 %v651
  %904 = vmatpush.bf16.msra.mxu0 %v635
  %905 = vmatpush.bf16.msra.mxu0 %v619
  %906 = vmatpush.bf16.msra.mxu0 %v603
  %907 = vmatpush.bf16.msra.mxu0 %v587
  %908 = vmatpush.bf16.msra.mxu0 %v571
  %909 = vmatpush.bf16.msra.mxu0 %v555
  %910 = vmatpush.bf16.msra.mxu0 %v539
  %911 = vmatmul.bf16.gmra.mxu0 %v17
  %v912 = vpop.f32.mrf.mxu0
  %v913 = vadd.f32 0.0, %v912
  %v914 = vpop.f32.mrf.mxu0
  %915 = vdwg.mxu0
  %916 = vmatpush.bf16.msra.mxu0 %v652
  %917 = vmatpush.bf16.msra.mxu0 %v636
  %918 = vmatpush.bf16.msra.mxu0 %v620
  %919 = vmatpush.bf16.msra.mxu0 %v604
  %920 = vmatpush.bf16.msra.mxu0 %v588
  %921 = vmatpush.bf16.msra.mxu0 %v572
  %922 = vmatpush.bf16.msra.mxu0 %v556
  %923 = vmatpush.bf16.msra.mxu0 %v540
  %924 = vmatmul.bf16.gmra.mxu0 %v17
  %v925 = vpop.f32.mrf.mxu0
  %v926 = vadd.f32 0.0, %v925
  %v927 = vpop.f32.mrf.mxu0
  %928 = vdwg.mxu0
  %929 = vmatpush.bf16.msra.mxu0 %v653
  %930 = vmatpush.bf16.msra.mxu0 %v637
  %931 = vmatpush.bf16.msra.mxu0 %v621
  %932 = vmatpush.bf16.msra.mxu0 %v605
  %933 = vmatpush.bf16.msra.mxu0 %v589
  %934 = vmatpush.bf16.msra.mxu0 %v573
  %935 = vmatpush.bf16.msra.mxu0 %v557
  %936 = vmatpush.bf16.msra.mxu0 %v541
  %937 = vmatmul.bf16.gmra.mxu0 %v17
  %v938 = vpop.f32.mrf.mxu0
  %v939 = vadd.f32 0.0, %v938
  %v940 = vpop.f32.mrf.mxu0
  %941 = vdwg.mxu0
  %942 = vmatpush.bf16.msra.mxu0 %v654
  %943 = vmatpush.bf16.msra.mxu0 %v638
  %944 = vmatpush.bf16.msra.mxu0 %v622
  %945 = vmatpush.bf16.msra.mxu0 %v606
  %946 = vmatpush.bf16.msra.mxu0 %v590
  %947 = vmatpush.bf16.msra.mxu0 %v574
  %948 = vmatpush.bf16.msra.mxu0 %v558
  %949 = vmatpush.bf16.msra.mxu0 %v542
  %950 = vmatmul.bf16.gmra.mxu0 %v17
  %v951 = vpop.f32.mrf.mxu0
  %v952 = vadd.f32 0.0, %v951
  %v953 = vpop.f32.mrf.mxu0
  %954 = vdwg.mxu0
  %955 = vmatpush.bf16.msra.mxu0 %v655
  %956 = vmatpush.bf16.msra.mxu0 %v639
  %957 = vmatpush.bf16.msra.mxu0 %v623
  %958 = vmatpush.bf16.msra.mxu0 %v607
  %959 = vmatpush.bf16.msra.mxu0 %v591
  %960 = vmatpush.bf16.msra.mxu0 %v575
  %961 = vmatpush.bf16.msra.mxu0 %v559
  %962 = vmatpush.bf16.msra.mxu0 %v543
  %963 = vmatmul.bf16.gmra.mxu0 %v17
  %v964 = vpop.f32.mrf.mxu0
  %v965 = vadd.f32 0.0, %v964
  %v966 = vpop.f32.mrf.mxu0
  %967 = vdwg.mxu0
  %968 = vmatpush.bf16.msra.mxu0 %v656
  %969 = vmatpush.bf16.msra.mxu0 %v640
  %970 = vmatpush.bf16.msra.mxu0 %v624
  %971 = vmatpush.bf16.msra.mxu0 %v608
  %972 = vmatpush.bf16.msra.mxu0 %v592
  %973 = vmatpush.bf16.msra.mxu0 %v576
  %974 = vmatpush.bf16.msra.mxu0 %v560
  %975 = vmatpush.bf16.msra.mxu0 %v544
  %976 = vmatmul.bf16.gmra.mxu0 %v17
  %v977 = vpop.f32.mrf.mxu0
  %v978 = vadd.f32 0.0, %v977
  %v979 = vpop.f32.mrf.mxu0
  %980 = vdwg.mxu0
  %981 = vmatpush.bf16.msra.mxu0 %v657
  %982 = vmatpush.bf16.msra.mxu0 %v641
  %983 = vmatpush.bf16.msra.mxu0 %v625
  %984 = vmatpush.bf16.msra.mxu0 %v609
  %985 = vmatpush.bf16.msra.mxu0 %v593
  %986 = vmatpush.bf16.msra.mxu0 %v577
  %987 = vmatpush.bf16.msra.mxu0 %v561
  %988 = vmatpush.bf16.msra.mxu0 %v545
  %989 = vmatmul.bf16.gmra.mxu0 %v17
  %v990 = vpop.f32.mrf.mxu0
  %v991 = vadd.f32 0.0, %v990
  %v992 = vpop.f32.mrf.mxu0
  %993 = vdwg.mxu0
  %v994 = vmax.f32 %v796, %v900
  %v995 = vmax.f32 %v809, %v913
  %v996 = vmax.f32 %v822, %v926
  %v997 = vmax.f32 %v835, %v939
  %v998 = vmax.f32 %v848, %v952
  %v999 = vmax.f32 %v861, %v965
  %v1000 = vmax.f32 %v874, %v978
  %v1001 = vmax.f32 %v887, %v991
  %v1002 = vmax.f32 %v994, 0.0
  %v1003 = vmax.f32 %v995, 0.0
  %v1004 = vmax.f32 %v996, 0.0
  %v1005 = vmax.f32 %v997, 0.0
  %v1006 = vmax.f32 %v998, 0.0
  %v1007 = vmax.f32 %v999, 0.0
  %v1008 = vmax.f32 %v1000, 0.0
  %v1009 = vmax.f32 %v1001, 0.0
  %v1010 = vpack.c.bf16 %v1002, %v1002
  %v1011 = vpack.c.bf16 %v1003, %v1003
  %v1012 = vpack.c.bf16 %v1004, %v1004
  %v1013 = vpack.c.bf16 %v1005, %v1005
  %v1014 = vpack.c.bf16 %v1006, %v1006
  %v1015 = vpack.c.bf16 %v1007, %v1007
  %v1016 = vpack.c.bf16 %v1008, %v1008
  %v1017 = vpack.c.bf16 %v1009, %v1009
  %v1018 = vld [vmem:[%s2] sm:$0xf]
  %v1019 = vld [vmem:[%s2 + $0x4] sm:$0xf]
  %v1020 = vld [vmem:[%s2 + $0x8] sm:$0xf]
  %v1021 = vld [vmem:[%s2 + $0xc] sm:$0xf]
  %v1022 = vld [vmem:[%s2 + $0x10] sm:$0xf]
  %v1023 = vld [vmem:[%s2 + $0x14] sm:$0xf]
  %v1024 = vld [vmem:[%s2 + $0x18] sm:$0xf]
  %v1025 = vld [vmem:[%s2 + $0x1c] sm:$0xf]
  %v1026 = vld [vmem:[%s2 + $0x20] sm:$0xf]
  %v1027 = vld [vmem:[%s2 + $0x24] sm:$0xf]
  %v1028 = vld [vmem:[%s2 + $0x28] sm:$0xf]
  %v1029 = vld [vmem:[%s2 + $0x2c] sm:$0xf]
  %v1030 = vld [vmem:[%s2 + $0x30] sm:$0xf]
  %v1031 = vld [vmem:[%s2 + $0x34] sm:$0xf]
  %v1032 = vld [vmem:[%s2 + $0x38] sm:$0xf]
  %v1033 = vld [vmem:[%s2 + $0x3c] sm:$0xf]
  %v1034 = vld [vmem:[%s2 + $0x40] sm:$0xf]
  %v1035 = vld [vmem:[%s2 + $0x44] sm:$0xf]
  %v1036 = vld [vmem:[%s2 + $0x48] sm:$0xf]
  %v1037 = vld [vmem:[%s2 + $0x4c] sm:$0xf]
  %v1038 = vld [vmem:[%s2 + $0x50] sm:$0xf]
  %v1039 = vld [vmem:[%s2 + $0x54] sm:$0xf]
  %v1040 = vld [vmem:[%s2 + $0x58] sm:$0xf]
  %v1041 = vld [vmem:[%s2 + $0x5c] sm:$0xf]
  %v1042 = vld [vmem:[%s2 + $0x60] sm:$0xf]
  %v1043 = vld [vmem:[%s2 + $0x64] sm:$0xf]
  %v1044 = vld [vmem:[%s2 + $0x68] sm:$0xf]
  %v1045 = vld [vmem:[%s2 + $0x6c] sm:$0xf]
  %v1046 = vld [vmem:[%s2 + $0x70] sm:$0xf]
  %v1047 = vld [vmem:[%s2 + $0x74] sm:$0xf]
  %v1048 = vld [vmem:[%s2 + $0x78] sm:$0xf]
  %v1049 = vld [vmem:[%s2 + $0x7c] sm:$0xf]
  %v1050 = vld [vmem:[%s2 + $0x80] sm:$0xf]
  %v1051 = vld [vmem:[%s2 + $0x84] sm:$0xf]
  %v1052 = vld [vmem:[%s2 + $0x88] sm:$0xf]
  %v1053 = vld [vmem:[%s2 + $0x8c] sm:$0xf]
  %v1054 = vld [vmem:[%s2 + $0x90] sm:$0xf]
  %v1055 = vld [vmem:[%s2 + $0x94] sm:$0xf]
  %v1056 = vld [vmem:[%s2 + $0x98] sm:$0xf]
  %v1057 = vld [vmem:[%s2 + $0x9c] sm:$0xf]
  %v1058 = vld [vmem:[%s2 + $0xa0] sm:$0xf]
  %v1059 = vld [vmem:[%s2 + $0xa4] sm:$0xf]
  %v1060 = vld [vmem:[%s2 + $0xa8] sm:$0xf]
  %v1061 = vld [vmem:[%s2 + $0xac] sm:$0xf]
  %v1062 = vld [vmem:[%s2 + $0xb0] sm:$0xf]
  %v1063 = vld [vmem:[%s2 + $0xb4] sm:$0xf]
  %v1064 = vld [vmem:[%s2 + $0xb8] sm:$0xf]
  %v1065 = vld [vmem:[%s2 + $0xbc] sm:$0xf]
  %v1066 = vld [vmem:[%s2 + $0xc0] sm:$0xf]
  %v1067 = vld [vmem:[%s2 + $0xc4] sm:$0xf]
  %v1068 = vld [vmem:[%s2 + $0xc8] sm:$0xf]
  %v1069 = vld [vmem:[%s2 + $0xcc] sm:$0xf]
  %v1070 = vld [vmem:[%s2 + $0xd0] sm:$0xf]
  %v1071 = vld [vmem:[%s2 + $0xd4] sm:$0xf]
  %v1072 = vld [vmem:[%s2 + $0xd8] sm:$0xf]
  %v1073 = vld [vmem:[%s2 + $0xdc] sm:$0xf]
  %v1074 = vld [vmem:[%s2 + $0xe0] sm:$0xf]
  %v1075 = vld [vmem:[%s2 + $0xe4] sm:$0xf]
  %v1076 = vld [vmem:[%s2 + $0xe8] sm:$0xf]
  %v1077 = vld [vmem:[%s2 + $0xec] sm:$0xf]
  %v1078 = vld [vmem:[%s2 + $0xf0] sm:$0xf]
  %v1079 = vld [vmem:[%s2 + $0xf4] sm:$0xf]
  %v1080 = vld [vmem:[%s2 + $0xf8] sm:$0xf]
  %v1081 = vld [vmem:[%s2 + $0xfc] sm:$0xf]
  %v1082 = vld [vmem:[%s2 + $0x100] sm:$0xf]
  %v1083 = vld [vmem:[%s2 + $0x104] sm:$0xf]
  %v1084 = vld [vmem:[%s2 + $0x108] sm:$0xf]
  %v1085 = vld [vmem:[%s2 + $0x10c] sm:$0xf]
  %v1086 = vld [vmem:[%s2 + $0x110] sm:$0xf]
  %v1087 = vld [vmem:[%s2 + $0x114] sm:$0xf]
  %v1088 = vld [vmem:[%s2 + $0x118] sm:$0xf]
  %v1089 = vld [vmem:[%s2 + $0x11c] sm:$0xf]
  %v1090 = vld [vmem:[%s2 + $0x120] sm:$0xf]
  %v1091 = vld [vmem:[%s2 + $0x124] sm:$0xf]
  %v1092 = vld [vmem:[%s2 + $0x128] sm:$0xf]
  %v1093 = vld [vmem:[%s2 + $0x12c] sm:$0xf]
  %v1094 = vld [vmem:[%s2 + $0x130] sm:$0xf]
  %v1095 = vld [vmem:[%s2 + $0x134] sm:$0xf]
  %v1096 = vld [vmem:[%s2 + $0x138] sm:$0xf]
  %v1097 = vld [vmem:[%s2 + $0x13c] sm:$0xf]
  %v1098 = vld [vmem:[%s2 + $0x140] sm:$0xf]
  %v1099 = vld [vmem:[%s2 + $0x144] sm:$0xf]
  %v1100 = vld [vmem:[%s2 + $0x148] sm:$0xf]
  %v1101 = vld [vmem:[%s2 + $0x14c] sm:$0xf]
  %v1102 = vld [vmem:[%s2 + $0x150] sm:$0xf]
  %v1103 = vld [vmem:[%s2 + $0x154] sm:$0xf]
  %v1104 = vld [vmem:[%s2 + $0x158] sm:$0xf]
  %v1105 = vld [vmem:[%s2 + $0x15c] sm:$0xf]
  %v1106 = vld [vmem:[%s2 + $0x160] sm:$0xf]
  %v1107 = vld [vmem:[%s2 + $0x164] sm:$0xf]
  %v1108 = vld [vmem:[%s2 + $0x168] sm:$0xf]
  %v1109 = vld [vmem:[%s2 + $0x16c] sm:$0xf]
  %v1110 = vld [vmem:[%s2 + $0x170] sm:$0xf]
  %v1111 = vld [vmem:[%s2 + $0x174] sm:$0xf]
  %v1112 = vld [vmem:[%s2 + $0x178] sm:$0xf]
  %v1113 = vld [vmem:[%s2 + $0x17c] sm:$0xf]
  %v1114 = vld [vmem:[%s2 + $0x180] sm:$0xf]
  %v1115 = vld [vmem:[%s2 + $0x184] sm:$0xf]
  %v1116 = vld [vmem:[%s2 + $0x188] sm:$0xf]
  %v1117 = vld [vmem:[%s2 + $0x18c] sm:$0xf]
  %v1118 = vld [vmem:[%s2 + $0x190] sm:$0xf]
  %v1119 = vld [vmem:[%s2 + $0x194] sm:$0xf]
  %v1120 = vld [vmem:[%s2 + $0x198] sm:$0xf]
  %v1121 = vld [vmem:[%s2 + $0x19c] sm:$0xf]
  %v1122 = vld [vmem:[%s2 + $0x1a0] sm:$0xf]
  %v1123 = vld [vmem:[%s2 + $0x1a4] sm:$0xf]
  %v1124 = vld [vmem:[%s2 + $0x1a8] sm:$0xf]
  %v1125 = vld [vmem:[%s2 + $0x1ac] sm:$0xf]
  %v1126 = vld [vmem:[%s2 + $0x1b0] sm:$0xf]
  %v1127 = vld [vmem:[%s2 + $0x1b4] sm:$0xf]
  %v1128 = vld [vmem:[%s2 + $0x1b8] sm:$0xf]
  %v1129 = vld [vmem:[%s2 + $0x1bc] sm:$0xf]
  %v1130 = vld [vmem:[%s2 + $0x1c0] sm:$0xf]
  %v1131 = vld [vmem:[%s2 + $0x1c4] sm:$0xf]
  %v1132 = vld [vmem:[%s2 + $0x1c8] sm:$0xf]
  %v1133 = vld [vmem:[%s2 + $0x1cc] sm:$0xf]
  %v1134 = vld [vmem:[%s2 + $0x1d0] sm:$0xf]
  %v1135 = vld [vmem:[%s2 + $0x1d4] sm:$0xf]
  %v1136 = vld [vmem:[%s2 + $0x1d8] sm:$0xf]
  %v1137 = vld [vmem:[%s2 + $0x1dc] sm:$0xf]
  %v1138 = vld [vmem:[%s2 + $0x1e0] sm:$0xf]
  %v1139 = vld [vmem:[%s2 + $0x1e4] sm:$0xf]
  %v1140 = vld [vmem:[%s2 + $0x1e8] sm:$0xf]
  %v1141 = vld [vmem:[%s2 + $0x1ec] sm:$0xf]
  %v1142 = vld [vmem:[%s2 + $0x1f0] sm:$0xf]
  %v1143 = vld [vmem:[%s2 + $0x1f4] sm:$0xf]
  %v1144 = vld [vmem:[%s2 + $0x1f8] sm:$0xf]
  %v1145 = vld [vmem:[%s2 + $0x1fc] sm:$0xf]
  %v1146 = vld [vmem:[%s3] sm:$0x1]
  %v1148 = vperm.slane %v1146, 0
  %v1278 = vunpack.c.l.b16 %v1018
  %v1279 = vunpack.c.l.b16 %v1019
  %v1280 = vunpack.c.l.b16 %v1020
  %v1281 = vunpack.c.l.b16 %v1021
  %v1282 = vunpack.c.l.b16 %v1022
  %v1283 = vunpack.c.l.b16 %v1023
  %v1284 = vunpack.c.l.b16 %v1024
  %v1285 = vunpack.c.l.b16 %v1025
  %v1286 = vunpack.c.l.b16 %v1026
  %v1287 = vunpack.c.l.b16 %v1027
  %v1288 = vunpack.c.l.b16 %v1028
  %v1289 = vunpack.c.l.b16 %v1029
  %v1290 = vunpack.c.l.b16 %v1030
  %v1291 = vunpack.c.l.b16 %v1031
  %v1292 = vunpack.c.l.b16 %v1032
  %v1293 = vunpack.c.l.b16 %v1033
  %v1294 = vunpack.c.l.b16 %v1034
  %v1295 = vunpack.c.l.b16 %v1035
  %v1296 = vunpack.c.l.b16 %v1036
  %v1297 = vunpack.c.l.b16 %v1037
  %v1298 = vunpack.c.l.b16 %v1038
  %v1299 = vunpack.c.l.b16 %v1039
  %v1300 = vunpack.c.l.b16 %v1040
  %v1301 = vunpack.c.l.b16 %v1041
  %v1302 = vunpack.c.l.b16 %v1042
  %v1303 = vunpack.c.l.b16 %v1043
  %v1304 = vunpack.c.l.b16 %v1044
  %v1305 = vunpack.c.l.b16 %v1045
  %v1306 = vunpack.c.l.b16 %v1046
  %v1307 = vunpack.c.l.b16 %v1047
  %v1308 = vunpack.c.l.b16 %v1048
  %v1309 = vunpack.c.l.b16 %v1049
  %v1310 = vunpack.c.l.b16 %v1050
  %v1311 = vunpack.c.l.b16 %v1051
  %v1312 = vunpack.c.l.b16 %v1052
  %v1313 = vunpack.c.l.b16 %v1053
  %v1314 = vunpack.c.l.b16 %v1054
  %v1315 = vunpack.c.l.b16 %v1055
  %v1316 = vunpack.c.l.b16 %v1056
  %v1317 = vunpack.c.l.b16 %v1057
  %v1318 = vunpack.c.l.b16 %v1058
  %v1319 = vunpack.c.l.b16 %v1059
  %v1320 = vunpack.c.l.b16 %v1060
  %v1321 = vunpack.c.l.b16 %v1061
  %v1322 = vunpack.c.l.b16 %v1062
  %v1323 = vunpack.c.l.b16 %v1063
  %v1324 = vunpack.c.l.b16 %v1064
  %v1325 = vunpack.c.l.b16 %v1065
  %v1326 = vunpack.c.l.b16 %v1066
  %v1327 = vunpack.c.l.b16 %v1067
  %v1328 = vunpack.c.l.b16 %v1068
  %v1329 = vunpack.c.l.b16 %v1069
  %v1330 = vunpack.c.l.b16 %v1070
  %v1331 = vunpack.c.l.b16 %v1071
  %v1332 = vunpack.c.l.b16 %v1072
  %v1333 = vunpack.c.l.b16 %v1073
  %v1334 = vunpack.c.l.b16 %v1074
  %v1335 = vunpack.c.l.b16 %v1075
  %v1336 = vunpack.c.l.b16 %v1076
  %v1337 = vunpack.c.l.b16 %v1077
  %v1338 = vunpack.c.l.b16 %v1078
  %v1339 = vunpack.c.l.b16 %v1079
  %v1340 = vunpack.c.l.b16 %v1080
  %v1341 = vunpack.c.l.b16 %v1081
  %v1342 = vunpack.c.l.b16 %v1082
  %v1343 = vunpack.c.l.b16 %v1083
  %v1344 = vunpack.c.l.b16 %v1084
  %v1345 = vunpack.c.l.b16 %v1085
  %v1346 = vunpack.c.l.b16 %v1086
  %v1347 = vunpack.c.l.b16 %v1087
  %v1348 = vunpack.c.l.b16 %v1088
  %v1349 = vunpack.c.l.b16 %v1089
  %v1350 = vunpack.c.l.b16 %v1090
  %v1351 = vunpack.c.l.b16 %v1091
  %v1352 = vunpack.c.l.b16 %v1092
  %v1353 = vunpack.c.l.b16 %v1093
  %v1354 = vunpack.c.l.b16 %v1094
  %v1355 = vunpack.c.l.b16 %v1095
  %v1356 = vunpack.c.l.b16 %v1096
  %v1357 = vunpack.c.l.b16 %v1097
  %v1358 = vunpack.c.l.b16 %v1098
  %v1359 = vunpack.c.l.b16 %v1099
  %v1360 = vunpack.c.l.b16 %v1100
  %v1361 = vunpack.c.l.b16 %v1101
  %v1362 = vunpack.c.l.b16 %v1102
  %v1363 = vunpack.c.l.b16 %v1103
  %v1364 = vunpack.c.l.b16 %v1104
  %v1365 = vunpack.c.l.b16 %v1105
  %v1366 = vunpack.c.l.b16 %v1106
  %v1367 = vunpack.c.l.b16 %v1107
  %v1368 = vunpack.c.l.b16 %v1108
  %v1369 = vunpack.c.l.b16 %v1109
  %v1370 = vunpack.c.l.b16 %v1110
  %v1371 = vunpack.c.l.b16 %v1111
  %v1372 = vunpack.c.l.b16 %v1112
  %v1373 = vunpack.c.l.b16 %v1113
  %v1374 = vunpack.c.l.b16 %v1114
  %v1375 = vunpack.c.l.b16 %v1115
  %v1376 = vunpack.c.l.b16 %v1116
  %v1377 = vunpack.c.l.b16 %v1117
  %v1378 = vunpack.c.l.b16 %v1118
  %v1379 = vunpack.c.l.b16 %v1119
  %v1380 = vunpack.c.l.b16 %v1120
  %v1381 = vunpack.c.l.b16 %v1121
  %v1382 = vunpack.c.l.b16 %v1122
  %v1383 = vunpack.c.l.b16 %v1123
  %v1384 = vunpack.c.l.b16 %v1124
  %v1385 = vunpack.c.l.b16 %v1125
  %v1386 = vunpack.c.l.b16 %v1126
  %v1387 = vunpack.c.l.b16 %v1127
  %v1388 = vunpack.c.l.b16 %v1128
  %v1389 = vunpack.c.l.b16 %v1129
  %v1390 = vunpack.c.l.b16 %v1130
  %v1391 = vunpack.c.l.b16 %v1131
  %v1392 = vunpack.c.l.b16 %v1132
  %v1393 = vunpack.c.l.b16 %v1133
  %v1394 = vunpack.c.l.b16 %v1134
  %v1395 = vunpack.c.l.b16 %v1135
  %v1396 = vunpack.c.l.b16 %v1136
  %v1397 = vunpack.c.l.b16 %v1137
  %v1398 = vunpack.c.l.b16 %v1138
  %v1399 = vunpack.c.l.b16 %v1139
  %v1400 = vunpack.c.l.b16 %v1140
  %v1401 = vunpack.c.l.b16 %v1141
  %v1402 = vunpack.c.l.b16 %v1142
  %v1403 = vunpack.c.l.b16 %v1143
  %v1404 = vunpack.c.l.b16 %v1144
  %v1405 = vunpack.c.l.b16 %v1145
  %v1406 = vpack.c.b16 %v1279, %v1278
  %v1407 = vpack.c.b16 %v1281, %v1280
  %v1408 = vpack.c.b16 %v1283, %v1282
  %v1409 = vpack.c.b16 %v1285, %v1284
  %v1410 = vpack.c.b16 %v1287, %v1286
  %v1411 = vpack.c.b16 %v1289, %v1288
  %v1412 = vpack.c.b16 %v1291, %v1290
  %v1413 = vpack.c.b16 %v1293, %v1292
  %v1414 = vpack.c.b16 %v1295, %v1294
  %v1415 = vpack.c.b16 %v1297, %v1296
  %v1416 = vpack.c.b16 %v1299, %v1298
  %v1417 = vpack.c.b16 %v1301, %v1300
  %v1418 = vpack.c.b16 %v1303, %v1302
  %v1419 = vpack.c.b16 %v1305, %v1304
  %v1420 = vpack.c.b16 %v1307, %v1306
  %v1421 = vpack.c.b16 %v1309, %v1308
  %v1422 = vpack.c.b16 %v1311, %v1310
  %v1423 = vpack.c.b16 %v1313, %v1312
  %v1424 = vpack.c.b16 %v1315, %v1314
  %v1425 = vpack.c.b16 %v1317, %v1316
  %v1426 = vpack.c.b16 %v1319, %v1318
  %v1427 = vpack.c.b16 %v1321, %v1320
  %v1428 = vpack.c.b16 %v1323, %v1322
  %v1429 = vpack.c.b16 %v1325, %v1324
  %v1430 = vpack.c.b16 %v1327, %v1326
  %v1431 = vpack.c.b16 %v1329, %v1328
  %v1432 = vpack.c.b16 %v1331, %v1330
  %v1433 = vpack.c.b16 %v1333, %v1332
  %v1434 = vpack.c.b16 %v1335, %v1334
  %v1435 = vpack.c.b16 %v1337, %v1336
  %v1436 = vpack.c.b16 %v1339, %v1338
  %v1437 = vpack.c.b16 %v1341, %v1340
  %v1438 = vpack.c.b16 %v1343, %v1342
  %v1439 = vpack.c.b16 %v1345, %v1344
  %v1440 = vpack.c.b16 %v1347, %v1346
  %v1441 = vpack.c.b16 %v1349, %v1348
  %v1442 = vpack.c.b16 %v1351, %v1350
  %v1443 = vpack.c.b16 %v1353, %v1352
  %v1444 = vpack.c.b16 %v1355, %v1354
  %v1445 = vpack.c.b16 %v1357, %v1356
  %v1446 = vpack.c.b16 %v1359, %v1358
  %v1447 = vpack.c.b16 %v1361, %v1360
  %v1448 = vpack.c.b16 %v1363, %v1362
  %v1449 = vpack.c.b16 %v1365, %v1364
  %v1450 = vpack.c.b16 %v1367, %v1366
  %v1451 = vpack.c.b16 %v1369, %v1368
  %v1452 = vpack.c.b16 %v1371, %v1370
  %v1453 = vpack.c.b16 %v1373, %v1372
  %v1454 = vpack.c.b16 %v1375, %v1374
  %v1455 = vpack.c.b16 %v1377, %v1376
  %v1456 = vpack.c.b16 %v1379, %v1378
  %v1457 = vpack.c.b16 %v1381, %v1380
  %v1458 = vpack.c.b16 %v1383, %v1382
  %v1459 = vpack.c.b16 %v1385, %v1384
  %v1460 = vpack.c.b16 %v1387, %v1386
  %v1461 = vpack.c.b16 %v1389, %v1388
  %v1462 = vpack.c.b16 %v1391, %v1390
  %v1463 = vpack.c.b16 %v1393, %v1392
  %v1464 = vpack.c.b16 %v1395, %v1394
  %v1465 = vpack.c.b16 %v1397, %v1396
  %v1466 = vpack.c.b16 %v1399, %v1398
  %v1467 = vpack.c.b16 %v1401, %v1400
  %v1468 = vpack.c.b16 %v1403, %v1402
  %v1469 = vpack.c.b16 %v1405, %v1404
  %1534 = vmatpush.bf16.msra.mxu0 %v1413
  %1535 = vmatpush.bf16.msra.mxu0 %v1412
  %1536 = vmatpush.bf16.msra.mxu0 %v1411
  %1537 = vmatpush.bf16.msra.mxu0 %v1410
  %1538 = vmatpush.bf16.msra.mxu0 %v1409
  %1539 = vmatpush.bf16.msra.mxu0 %v1408
  %1540 = vmatpush.bf16.msra.mxu0 %v1407
  %1541 = vmatpush.bf16.msra.mxu0 %v1406
  %1542 = vmatmul.bf16.gmra.mxu0 %v1010
  %v1543 = vpop.f32.mrf.mxu0
  %v1544 = vadd.f32 %v1148, %v1543
  %v1545 = vpop.f32.mrf.mxu0
  %1546 = vdwg.mxu0
  %1547 = vmatpush.bf16.msra.mxu0 %v1421
  %1548 = vmatpush.bf16.msra.mxu0 %v1420
  %1549 = vmatpush.bf16.msra.mxu0 %v1419
  %1550 = vmatpush.bf16.msra.mxu0 %v1418
  %1551 = vmatpush.bf16.msra.mxu0 %v1417
  %1552 = vmatpush.bf16.msra.mxu0 %v1416
  %1553 = vmatpush.bf16.msra.mxu0 %v1415
  %1554 = vmatpush.bf16.msra.mxu0 %v1414
  %1555 = vmatmul.bf16.gmra.mxu0 %v1011
  %v1556 = vpop.f32.mrf.mxu0
  %v1557 = vadd.f32 %v1544, %v1556
  %v1558 = vpop.f32.mrf.mxu0
  %1559 = vdwg.mxu0
  %1560 = vmatpush.bf16.msra.mxu0 %v1429
  %1561 = vmatpush.bf16.msra.mxu0 %v1428
  %1562 = vmatpush.bf16.msra.mxu0 %v1427
  %1563 = vmatpush.bf16.msra.mxu0 %v1426
  %1564 = vmatpush.bf16.msra.mxu0 %v1425
  %1565 = vmatpush.bf16.msra.mxu0 %v1424
  %1566 = vmatpush.bf16.msra.mxu0 %v1423
  %1567 = vmatpush.bf16.msra.mxu0 %v1422
  %1568 = vmatmul.bf16.gmra.mxu0 %v1012
  %v1569 = vpop.f32.mrf.mxu0
  %v1570 = vadd.f32 %v1557, %v1569
  %v1571 = vpop.f32.mrf.mxu0
  %1572 = vdwg.mxu0
  %1573 = vmatpush.bf16.msra.mxu0 %v1437
  %1574 = vmatpush.bf16.msra.mxu0 %v1436
  %1575 = vmatpush.bf16.msra.mxu0 %v1435
  %1576 = vmatpush.bf16.msra.mxu0 %v1434
  %1577 = vmatpush.bf16.msra.mxu0 %v1433
  %1578 = vmatpush.bf16.msra.mxu0 %v1432
  %1579 = vmatpush.bf16.msra.mxu0 %v1431
  %1580 = vmatpush.bf16.msra.mxu0 %v1430
  %1581 = vmatmul.bf16.gmra.mxu0 %v1013
  %v1582 = vpop.f32.mrf.mxu0
  %v1583 = vadd.f32 %v1570, %v1582
  %v1584 = vpop.f32.mrf.mxu0
  %1585 = vdwg.mxu0
  %1586 = vmatpush.bf16.msra.mxu0 %v1445
  %1587 = vmatpush.bf16.msra.mxu0 %v1444
  %1588 = vmatpush.bf16.msra.mxu0 %v1443
  %1589 = vmatpush.bf16.msra.mxu0 %v1442
  %1590 = vmatpush.bf16.msra.mxu0 %v1441
  %1591 = vmatpush.bf16.msra.mxu0 %v1440
  %1592 = vmatpush.bf16.msra.mxu0 %v1439
  %1593 = vmatpush.bf16.msra.mxu0 %v1438
  %1594 = vmatmul.bf16.gmra.mxu0 %v1014
  %v1595 = vpop.f32.mrf.mxu0
  %v1596 = vadd.f32 %v1583, %v1595
  %v1597 = vpop.f32.mrf.mxu0
  %1598 = vdwg.mxu0
  %1599 = vmatpush.bf16.msra.mxu0 %v1453
  %1600 = vmatpush.bf16.msra.mxu0 %v1452
  %1601 = vmatpush.bf16.msra.mxu0 %v1451
  %1602 = vmatpush.bf16.msra.mxu0 %v1450
  %1603 = vmatpush.bf16.msra.mxu0 %v1449
  %1604 = vmatpush.bf16.msra.mxu0 %v1448
  %1605 = vmatpush.bf16.msra.mxu0 %v1447
  %1606 = vmatpush.bf16.msra.mxu0 %v1446
  %1607 = vmatmul.bf16.gmra.mxu0 %v1015
  %v1608 = vpop.f32.mrf.mxu0
  %v1609 = vadd.f32 %v1596, %v1608
  %v1610 = vpop.f32.mrf.mxu0
  %1611 = vdwg.mxu0
  %1612 = vmatpush.bf16.msra.mxu0 %v1461
  %1613 = vmatpush.bf16.msra.mxu0 %v1460
  %1614 = vmatpush.bf16.msra.mxu0 %v1459
  %1615 = vmatpush.bf16.msra.mxu0 %v1458
  %1616 = vmatpush.bf16.msra.mxu0 %v1457
  %1617 = vmatpush.bf16.msra.mxu0 %v1456
  %1618 = vmatpush.bf16.msra.mxu0 %v1455
  %1619 = vmatpush.bf16.msra.mxu0 %v1454
  %1620 = vmatmul.bf16.gmra.mxu0 %v1016
  %v1621 = vpop.f32.mrf.mxu0
  %v1622 = vadd.f32 %v1609, %v1621
  %v1623 = vpop.f32.mrf.mxu0
  %1624 = vdwg.mxu0
  %1625 = vmatpush.bf16.msra.mxu0 %v1469
  %1626 = vmatpush.bf16.msra.mxu0 %v1468
  %1627 = vmatpush.bf16.msra.mxu0 %v1467
  %1628 = vmatpush.bf16.msra.mxu0 %v1466
  %1629 = vmatpush.bf16.msra.mxu0 %v1465
  %1630 = vmatpush.bf16.msra.mxu0 %v1464
  %1631 = vmatpush.bf16.msra.mxu0 %v1463
  %1632 = vmatpush.bf16.msra.mxu0 %v1462
  %1633 = vmatmul.bf16.gmra.mxu0 %v1017
  %v1634 = vpop.f32.mrf.mxu0
  %v1635 = vadd.f32 %v1622, %v1634
  %v1636 = vpop.f32.mrf.mxu0
  %1637 = vdwg.mxu0
  %1638 = vst [vmem:[%s4] sm:$0xff] %v1635
  // Predicated region
  $region18: #{cnn_multiclass_forward.1} parent=0 // pred_check
    _
  $region19: #{cnn_multiclass_forward.1} parent=0 // pred_check_branch
    %1640 = sbr.rel (0) target = $region21
  $region20: #{cnn_multiclass_forward.1} parent=0 // pred_region
    _
  $region21: #{cnn_multiclass_forward.1} parent=0 // pred_fallthru
    _
  // Predicated region
  $region22: #{cnn_multiclass_forward.1} parent=0 // pred_check
    _
  $region23: #{cnn_multiclass_forward.1} parent=0 // pred_check_branch
    %1642 = sbr.rel (0) target = $region25
  $region24: #{cnn_multiclass_forward.1} parent=0 // pred_region
    _
  $region25: #{cnn_multiclass_forward.1} parent=0 // pred_fallthru
    _

</llo_original>
